<compile_context>
chip_gen: v5e
topology: v5e:2x2
jax: 0.10.0
libtpu: 0.0.40
codegen_flags: <defaults>
</compile_context>

<pallas_src>
import jax
import jax.numpy as jnp
import numpy as np
from jax.experimental import pallas as pl
from jax.experimental.pallas import tpu as pltpu

_LANE = 128
_MAX_COLS = 4096                      # lane-dense slab width cap (multiple of 128)
_TARGET_TILE_BYTES = 2 * 1024 * 1024  # ~2 MiB tiles -> 4x buffered = 8 MiB VMEM


def _identity_kernel(x_ref, o_ref):
    # forward(x) = x : copy the current tile.
    o_ref[...] = x_ref[...]


def _sublane_multiple(dtype) -> int:
    itemsize = jnp.dtype(dtype).itemsize
    return {4: 8, 2: 16, 1: 32}.get(itemsize, 8)


def identity_pallas(x: jnp.ndarray) -> jnp.ndarray:
    """Identity forward pass: returns an array equal to x (same shape/dtype)."""
    orig_shape = x.shape
    dtype = x.dtype
    n = int(x.size)
    if n == 0:
        return x

    itemsize = jnp.dtype(dtype).itemsize
    sub = _sublane_multiple(dtype)

    # ---- build a lane-dense 2D slab (no copy on the aligned fast path) ----
    needs_pad = (n % _LANE) != 0
    if needs_pad:
        n_work = -(-n // _LANE) * _LANE
        flat = jnp.pad(x.reshape(-1), (0, n_work - n))  # only path with a copy
    else:
        n_work = n
        flat = x.reshape(-1)                            # metadata-only reshape

    # Widest cols <= _MAX_COLS that is a multiple of 128 and divides n_work.
    cols = _LANE
    for c in range(min(n_work, _MAX_COLS), _LANE - 1, -_LANE):
        if n_work % c == 0:
            cols = c
            break
    rows = n_work // cols
    x2d = flat.reshape(rows, cols)

    # ---- tile rows so each block is ~2 MiB --------------------------------
    row_bytes = cols * itemsize
    max_tile_r = max(sub, (_TARGET_TILE_BYTES // row_bytes) // sub * sub)
    if rows <= max_tile_r:
        tile_r = rows        # one block; "equals full dim" satisfies (8,128) rule
    else:
        tile_r = max_tile_r  # multiple of `sub`; cdiv grid masks the tail block
    grid_r = pl.cdiv(rows, tile_r)

    # Alias input->output: x2d is a fresh intermediate (the caller's x is never
    # donated).  Guard against the degenerate case where no reshape happened.
    aliases = {} if x2d is x else {0: 0}

    out2d = pl.pallas_call(
        _identity_kernel,
        out_shape=jax.ShapeDtypeStruct((rows, cols), dtype),
        grid=(grid_r,),
        in_specs=[pl.BlockSpec((tile_r, cols), lambda i: (i, 0))],
        out_specs=pl.BlockSpec((tile_r, cols), lambda i: (i, 0)),
        input_output_aliases=aliases,
        compiler_params=pltpu.CompilerParams(
            dimension_semantics=("parallel",),
        ),
    )(x2d)

    if needs_pad:
        return out2d.reshape(-1)[:n].reshape(orig_shape)
    return out2d.reshape(orig_shape)


if __name__ == "__main__":
    key = jax.random.PRNGKey(0)
    k1, k2 = jax.random.split(key)

    # Primary case: NCHW feature map (Identity typically replaces a conv/fc layer).
    x = jax.random.normal(key, (2, 4, 16, 16), dtype=jnp.float32)
    x_host = np.asarray(x)
    y = jax.block_until_ready(identity_pallas(x))
    assert y.shape == x_host.shape and y.dtype == x_host.dtype
    assert np.array_equal(np.asarray(y), x_host)

    # Multi-tile grid with a partial trailing row block (exercises cdiv masking).
    x_big = jax.random.normal(k1, (136, 64, 64), dtype=jnp.float32)
    xb_host = np.asarray(x_big)
    yb = jax.block_until_ready(identity_pallas(x_big))
    assert yb.shape == xb_host.shape and yb.dtype == xb_host.dtype
    assert np.array_equal(np.asarray(yb), xb_host)

    # Unaligned size + sub-32-bit dtype (exercises padded path / bf16 sublane rule).
    x_bf = jax.random.normal(k2, (3, 5, 7), dtype=jnp.bfloat16)
    xbf_host = np.asarray(x_bf)
    ybf = jax.block_until_ready(identity_pallas(x_bf))
    assert ybf.shape == xbf_host.shape and ybf.dtype == xbf_host.dtype
    assert np.array_equal(np.asarray(ybf), xbf_host)

    print("KERNEL_OK")
</pallas_src>

<mosaic_0001>
module attributes {stable_mosaic.version = 11 : i64} {
  func.func @_identity_kernel(%arg0: i32, %arg1: memref<1x2048xf32, #tpu.memory_space<vmem>>, %arg2: memref<1x2048xf32, #tpu.memory_space<vmem>>) attributes {dimension_semantics = [#tpu.dimension_semantics<parallel>], iteration_bounds = array<i64: 1>, scalar_prefetch = 0 : i64, scratch_operands = 0 : i64, tpu.core_type = #tpu.core_type<tc>, window_params = [{transform_indices = @transform_0, window_bounds = array<i64: 1, 2048>}, {transform_indices = @transform_1, window_bounds = array<i64: 1, 2048>}]} {
    %c0 = arith.constant 0 : index
    %c0_0 = arith.constant 0 : index
    %0 = vector.load %arg1[%c0, %c0_0] : memref<1x2048xf32, #tpu.memory_space<vmem>>, vector<1x2048xf32>
    %c0_1 = arith.constant 0 : index
    %c0_2 = arith.constant 0 : index
    %1 = vector.load %arg2[%c0_1, %c0_2] : memref<1x2048xf32, #tpu.memory_space<vmem>>, vector<1x2048xf32>
    tpu.vector_store %arg2[%c0_1, %c0_2], %0 {strides = array<i32>} : memref<1x2048xf32, #tpu.memory_space<vmem>>, vector<1x2048xf32>,
    return
  }
  func.func @transform_0(%arg0: i32) -> (i32, i32) {
    %c0_i32 = arith.constant 0 : i32
    %c0_i32_0 = arith.constant 0 : i32
    return %arg0, %c0_i32 : i32, i32
  }
  func.func @transform_1(%arg0: i32) -> (i32, i32) {
    %c0_i32 = arith.constant 0 : i32
    %c0_i32_0 = arith.constant 0 : i32
    return %arg0, %c0_i32 : i32, i32
  }
}

</mosaic_0001>

<llo_original>
// kernel: tpu_custom_call.1
$region0: #{tpu_custom_call.1}
  #allocation0 [shape = 'u32[]', space=smem, size = 0x4, offset = 0x4, fixed_abs, tag = 'smem constant byte address 0x4 - core index']
  #allocation1 [shape = 'u32[72,128]{1,0:T(1,128)}', space=vmem, size = 0x9000, scoped, tag = 'internal scratch']
  %s0 = inlined_call_operand.hbm [shape: f32[1,2048], index: 0, kind: input, shape index: {}, may-alias: {0,1}]
  %s1 = inlined_call_operand.hbm [shape: f32[1,2048], index: 1, kind: output, shape index: {}, may-alias: {0,1}]
  %s2 = sld [smem:[#allocation0]]
  $region18: #{tpu_custom_call.1} parent=0
    _
  %s4 = ssub.s32 1, %s2
  %s5 = scalar_select 0, %s4, %s2
  $region1: #{tpu_custom_call.1} parent=0
    #allocation2 [shape = 'u8[8192]{0}', space=vmem, size = 0x2000, scoped, tag = 'input window, operand 0, single buffered']
    #allocation3 [shape = 's32[1]{0}', space=sflag, size = 0x4, scoped, tag = 'scoped memory for tpu_custom_call.1']
    #allocation4 [shape = 's32[1]{0}', space=sflag, size = 0x4, scoped, tag = 'scoped memory for tpu_custom_call.1']
    #allocation5 [shape = 'u8[8192]{0}', space=vmem, size = 0x2000, scoped, tag = 'output window, operand 0, single buffered']
    %6 = vsyncpa [#allocation3], 0
    %7 = vsyncpa [#allocation4], 0
    // Predicated region
    $region2: #{tpu_custom_call.1} parent=1 // pred_check
      _
    $region3: #{tpu_custom_call.1} parent=1 // pred_check_branch
      %9 = sbr.rel (0) target = $region5
    $region4: #{tpu_custom_call.1} parent=1 // pred_region
      %11 = vsyncadd [#allocation3], 0
      %s13 = sshll.u32 %s0, 4
      %s14 = int_to_ptr.hbm [resolvable:$true] %s13
      %s15 = sshll.u32 [#allocation2], 4
      %s16 = int_to_ptr.vmem [resolvable:$true] %s15
      %18 = dma.hbm_to_vmem [thread:$0]  %s14, 256, %s16, [#allocation3]
    $region5: #{tpu_custom_call.1} parent=1 // pred_fallthru
      _
    // Predicated region
    $region6: #{tpu_custom_call.1} parent=1 // pred_check
      _
    $region7: #{tpu_custom_call.1} parent=1 // pred_check_branch
      %20 = sbr.rel (0) target = $region9
    $region8: #{tpu_custom_call.1} parent=1 // pred_region
      %22 = dma.done [#allocation3], 256
    $region9: #{tpu_custom_call.1} parent=1 // pred_fallthru
      _
    %v23 = vld [vmem:[#allocation2] sm:$0xff]
    %v24 = vld [vmem:[#allocation2 + $0x8] sm:$0xff]
    %25 = vst [vmem:[#allocation5] sm:$0xff] %v23
    %26 = vst [vmem:[#allocation5 + $0x8] sm:$0xff] %v24
    // Predicated region
    $region10: #{tpu_custom_call.1} parent=1 // pred_check
      _
    $region11: #{tpu_custom_call.1} parent=1 // pred_check_branch
      %28 = sbr.rel (0) target = $region13
    $region12: #{tpu_custom_call.1} parent=1 // pred_region
      %30 = vsyncadd [#allocation4], 0
      %s32 = sshll.u32 [#allocation5], 4
      %s33 = int_to_ptr.vmem [resolvable:$true] %s32
      %s34 = sshll.u32 %s1, 4
      %s35 = int_to_ptr.hbm [resolvable:$true] %s34
      %37 = dma.vmem_to_hbm [thread:$0]  %s33, 256, %s35, [#allocation4]
    $region13: #{tpu_custom_call.1} parent=1 // pred_fallthru
      _
    // Predicated region
    $region14: #{tpu_custom_call.1} parent=1 // pred_check
      _
    $region15: #{tpu_custom_call.1} parent=1 // pred_check_branch
      %39 = sbr.rel (0) target = $region17
    $region16: #{tpu_custom_call.1} parent=1 // pred_region
      %41 = dma.done [#allocation4], 256
    $region17: #{tpu_custom_call.1} parent=1 // pred_fallthru
      _
    %42 = vsyncpa [#allocation3], 1
    %43 = vsyncpa [#allocation4], 1

</llo_original>
